<compile_context>
chip_gen: v6e
topology: v6e:2x2x1
jax: 0.10.0
libtpu: 0.0.40
codegen_flags: <defaults>
</compile_context>

<pallas_src>
import functools

import jax
import jax.numpy as jnp
from jax.experimental import pallas as pl
from jax.experimental.pallas import tpu as pltpu

_LANES = 128
_SUBLANES = 8
_TILE = _SUBLANES * _LANES  # 1024 elements


def _gaines_mul_kernel(a_ref, b_ref, o_ref, *, mode):
    a = a_ref[...]
    b = b_ref[...]
    if mode == "unipolar":
        # AND gate on {0,1} bits == elementwise product.
        r = (a * b).astype(o_ref.dtype)
    elif mode == "bipolar":
        # XNOR gate on {0,1} bits == equality.
        r = (a == b).astype(o_ref.dtype)
    else:
        raise ValueError("UnaryMul mode is not implemented.")
    o_ref[...] = r


def gaines_mul(input_0, input_1, mode="bipolar", stype=jnp.float32,
               block_rows=2048):
    """Elementwise Gaines stochastic multiply. Matches GainesMul.forward.

    Inputs must be stochastic bit tensors with values in {0, 1}.
    """
    if mode not in ("unipolar", "bipolar"):
        raise ValueError("UnaryMul mode is not implemented.")
    assert input_0.shape == input_1.shape, "elementwise op: shapes must match"
    orig_shape = input_0.shape
    n = 1
    for d in orig_shape:
        n *= d

    a = input_0.reshape(-1)
    b = input_1.reshape(-1)

    aligned = (n % _TILE == 0) and (n > 0)
    if aligned:
        # Fast path: no pad copy, no output slice.
        n_pad = n
    else:
        # Slow path: pad only the tail so the slab is (rows mult of 8, 128).
        n_pad = pl.cdiv(max(n, 1), _TILE) * _TILE
        a = jnp.pad(a, (0, n_pad - n))
        b = jnp.pad(b, (0, n_pad - n))

    rows = n_pad // _LANES
    a = a.reshape(rows, _LANES)
    b = b.reshape(rows, _LANES)

    # ~1 MiB f32 block per input at (2048, 128); double buffering of
    # 3 arrays -> ~6 MiB VMEM, well inside every generation's default limit.
    br = min(block_rows, rows)
    grid = (pl.cdiv(rows, br),)
    spec = pl.BlockSpec((br, _LANES), lambda i: (i, 0))

    out = pl.pallas_call(
        functools.partial(_gaines_mul_kernel, mode=mode),
        out_shape=jax.ShapeDtypeStruct((rows, _LANES), stype),
        grid_spec=pltpu.PrefetchScalarGridSpec(
            num_scalar_prefetch=0,
            grid=grid,
            in_specs=[spec, spec],
            out_specs=spec,
        ),
        compiler_params=pltpu.CompilerParams(
            dimension_semantics=("parallel",)),
    )(a, b)

    if aligned:
        return out.reshape(orig_shape)
    return out.reshape(-1)[:n].reshape(orig_shape)


def _reference(input_0, input_1, mode="bipolar"):
    # Faithful int-domain reference (matches the PyTorch module for {0,1}).
    a = input_0.astype(jnp.int32)
    b = input_1.astype(jnp.int32)
    if mode == "unipolar":
        r = a & b
    else:
        r = 1 - (a ^ b)
    return r.astype(jnp.float32)


if __name__ == "__main__":
    key = jax.random.PRNGKey(0)
    k0, k1, k2, k3 = jax.random.split(key, 4)

    ok = True

    # Aligned NCHW stochastic bit tensors (fast path).
    shape = (2, 4, 16, 16)
    x0 = jax.random.bernoulli(k0, p=0.5, shape=shape).astype(jnp.float32)
    x1 = jax.random.bernoulli(k1, p=0.5, shape=shape).astype(jnp.float32)
    for mode in ("bipolar", "unipolar"):
        out = jax.block_until_ready(gaines_mul(x0, x1, mode=mode))
        ref = _reference(x0, x1, mode=mode)
        if out.shape != shape or out.dtype != jnp.float32:
            ok = False
        if not jnp.array_equal(out, ref):
            ok = False

    # Unaligned shape (padded path).
    shape_u = (3, 5, 7, 11)
    y0 = jax.random.bernoulli(k2, p=0.5, shape=shape_u).astype(jnp.float32)
    y1 = jax.random.bernoulli(k3, p=0.5, shape=shape_u).astype(jnp.float32)
    for mode in ("bipolar", "unipolar"):
        out = jax.block_until_ready(gaines_mul(y0, y1, mode=mode))
        ref = _reference(y0, y1, mode=mode)
        if out.shape != shape_u or out.dtype != jnp.float32:
            ok = False
        if not jnp.array_equal(out, ref):
            ok = False

    if ok:
        print("KERNEL_OK")
    else:
        print("KERNEL_MISMATCH")
</pallas_src>

<mosaic_0001>
module attributes {stable_mosaic.version = 11 : i64} {
  func.func @_gaines_mul_kernel(%arg0: i32, %arg1: memref<16x128xf32, #tpu.memory_space<vmem>>, %arg2: memref<16x128xf32, #tpu.memory_space<vmem>>, %arg3: memref<16x128xf32, #tpu.memory_space<vmem>>) attributes {dimension_semantics = [#tpu.dimension_semantics<parallel>], iteration_bounds = array<i64: 1>, scalar_prefetch = 0 : i64, scratch_operands = 0 : i64, tpu.core_type = #tpu.core_type<tc>, window_params = [{transform_indices = @transform_0, window_bounds = array<i64: 16, 128>}, {transform_indices = @transform_1, window_bounds = array<i64: 16, 128>}, {transform_indices = @transform_2, window_bounds = array<i64: 16, 128>}]} {
    %c0 = arith.constant 0 : index
    %c0_0 = arith.constant 0 : index
    %0 = vector.load %arg1[%c0, %c0_0] : memref<16x128xf32, #tpu.memory_space<vmem>>, vector<16x128xf32>
    %c0_1 = arith.constant 0 : index
    %c0_2 = arith.constant 0 : index
    %1 = vector.load %arg2[%c0_1, %c0_2] : memref<16x128xf32, #tpu.memory_space<vmem>>, vector<16x128xf32>
    %2 = arith.cmpf oeq, %0, %1 : vector<16x128xf32>
    %3 = arith.extui %2 : vector<16x128xi1> to vector<16x128xi32>
    %4 = arith.sitofp %3 : vector<16x128xi32> to vector<16x128xf32>
    %c0_3 = arith.constant 0 : index
    %c0_4 = arith.constant 0 : index
    %5 = vector.load %arg3[%c0_3, %c0_4] : memref<16x128xf32, #tpu.memory_space<vmem>>, vector<16x128xf32>
    tpu.vector_store %arg3[%c0_3, %c0_4], %4 {strides = array<i32>} : memref<16x128xf32, #tpu.memory_space<vmem>>, vector<16x128xf32>,
    return
  }
  func.func @transform_0(%arg0: i32) -> (i32, i32) {
    %c0_i32 = arith.constant 0 : i32
    %c0_i32_0 = arith.constant 0 : i32
    return %arg0, %c0_i32 : i32, i32
  }
  func.func @transform_1(%arg0: i32) -> (i32, i32) {
    %c0_i32 = arith.constant 0 : i32
    %c0_i32_0 = arith.constant 0 : i32
    return %arg0, %c0_i32 : i32, i32
  }
  func.func @transform_2(%arg0: i32) -> (i32, i32) {
    %c0_i32 = arith.constant 0 : i32
    %c0_i32_0 = arith.constant 0 : i32
    return %arg0, %c0_i32 : i32, i32
  }
}

</mosaic_0001>

<llo_original>
// kernel: tpu_custom_call.1
$region0: #{tpu_custom_call.1}
  #allocation0 [shape = 'u32[]', space=smem, size = 0x4, offset = 0x4, fixed_abs, tag = 'smem constant byte address 0x4 - core index']
  #allocation1 [shape = 'u32[144,128]{1,0:T(1,128)}', space=vmem, size = 0x12000, scoped, tag = 'internal scratch']
  %s0 = inlined_call_operand.hbm [shape: f32[16,128], index: 0, kind: input, shape index: {}]
  %s1 = inlined_call_operand.hbm [shape: f32[16,128], index: 1, kind: input, shape index: {}]
  %s2 = inlined_call_operand.hbm [shape: f32[16,128], index: 2, kind: output, shape index: {}]
  %s3 = sld [smem:[#allocation0]]
  $region26: #{tpu_custom_call.1} parent=0
    _
  %s5 = ssub.s32 1, %s3
  %s6 = scalar_select 0, %s5, %s3
  $region1: #{tpu_custom_call.1} parent=0
    #allocation2 [shape = 'u8[8192]{0}', space=vmem, size = 0x2000, scoped, tag = 'input window, operand 0, single buffered']
    #allocation3 [shape = 's32[1]{0}', space=sflag, size = 0x4, scoped, tag = 'scoped memory for tpu_custom_call.1']
    #allocation4 [shape = 's32[1]{0}', space=sflag, size = 0x4, scoped, tag = 'scoped memory for tpu_custom_call.1']
    #allocation5 [shape = 'u8[8192]{0}', space=vmem, size = 0x2000, scoped, tag = 'input window, operand 1, single buffered']
    #allocation6 [shape = 's32[1]{0}', space=sflag, size = 0x4, scoped, tag = 'scoped memory for tpu_custom_call.1']
    #allocation7 [shape = 'u8[8192]{0}', space=vmem, size = 0x2000, scoped, tag = 'output window, operand 0, single buffered']
    %7 = vsyncpa [#allocation3], 0
    %8 = vsyncpa [#allocation6], 0
    %9 = vsyncpa [#allocation4], 0
    // Predicated region
    $region2: #{tpu_custom_call.1} parent=1 // pred_check
      _
    $region3: #{tpu_custom_call.1} parent=1 // pred_check_branch
      %11 = sbr.rel (0) target = $region5
    $region4: #{tpu_custom_call.1} parent=1 // pred_region
      %s13 = ssub.s32 256, 256
      %14 = vsyncadd [#allocation3], %s13
      %s15 = sshll.u32 [#allocation2], 4
      %s16 = int_to_ptr.vmem [resolvable:$true] %s15
      %21 = dma.hbm_to_vmem [thread:$0]  %s0, 256, %s16, [#allocation3], 128, 128, 8
    $region5: #{tpu_custom_call.1} parent=1 // pred_fallthru
      _
    // Predicated region
    $region6: #{tpu_custom_call.1} parent=1 // pred_check
      _
    $region7: #{tpu_custom_call.1} parent=1 // pred_check_branch
      %23 = sbr.rel (0) target = $region9
    $region8: #{tpu_custom_call.1} parent=1 // pred_region
      %s25 = ssub.s32 256, 256
      %26 = vsyncadd [#allocation6], %s25
      %s27 = sshll.u32 [#allocation5], 4
      %s28 = int_to_ptr.vmem [resolvable:$true] %s27
      %33 = dma.hbm_to_vmem [thread:$0]  %s1, 256, %s28, [#allocation6], 128, 128, 8
    $region9: #{tpu_custom_call.1} parent=1 // pred_fallthru
      _
    // Predicated region
    $region10: #{tpu_custom_call.1} parent=1 // pred_check
      _
    $region11: #{tpu_custom_call.1} parent=1 // pred_check_branch
      %35 = sbr.rel (0) target = $region13
    $region12: #{tpu_custom_call.1} parent=1 // pred_region
      %36 = dma.done [#allocation3], 256
    $region13: #{tpu_custom_call.1} parent=1 // pred_fallthru
      _
    // Predicated region
    $region14: #{tpu_custom_call.1} parent=1 // pred_check
      _
    $region15: #{tpu_custom_call.1} parent=1 // pred_check_branch
      %38 = sbr.rel (0) target = $region17
    $region16: #{tpu_custom_call.1} parent=1 // pred_region
      %39 = dma.done [#allocation6], 256
    $region17: #{tpu_custom_call.1} parent=1 // pred_fallthru
      _
    %v40 = vld [vmem:[#allocation2] sm:$0xff]
    %v41 = vld [vmem:[#allocation2 + $0x8] sm:$0xff]
    %v42 = vld [vmem:[#allocation5] sm:$0xff]
    %v43 = vld [vmem:[#allocation5 + $0x8] sm:$0xff]
    %vm44 = vcmp.eq.f32.partialorder %v40, %v42
    %vm45 = vcmp.eq.f32.partialorder %v41, %v43
    %v46 = vsel %vm44, 1, 0
    %v47 = vsel %vm45, 1, 0
    %v48 = vcvt.s32.f32 %v46
    %v49 = vcvt.s32.f32 %v47
    %50 = vst [vmem:[#allocation7] sm:$0xff] %v48
    %51 = vst [vmem:[#allocation7 + $0x8] sm:$0xff] %v49
    // Predicated region
    $region18: #{tpu_custom_call.1} parent=1 // pred_check
      _
    $region19: #{tpu_custom_call.1} parent=1 // pred_check_branch
      %53 = sbr.rel (0) target = $region21
    $region20: #{tpu_custom_call.1} parent=1 // pred_region
      %s55 = ssub.s32 256, 256
      %56 = vsyncadd [#allocation4], %s55
      %s57 = sshll.u32 [#allocation7], 4
      %s58 = int_to_ptr.vmem [resolvable:$true] %s57
      %63 = dma.vmem_to_hbm [thread:$0]  %s58, 256, %s2, [#allocation4], 128, 128, 8
    $region21: #{tpu_custom_call.1} parent=1 // pred_fallthru
      _
    // Predicated region
    $region22: #{tpu_custom_call.1} parent=1 // pred_check
      _
    $region23: #{tpu_custom_call.1} parent=1 // pred_check_branch
      %65 = sbr.rel (0) target = $region25
    $region24: #{tpu_custom_call.1} parent=1 // pred_region
      %66 = dma.done [#allocation4], 256
    $region25: #{tpu_custom_call.1} parent=1 // pred_fallthru
      _
    %67 = vsyncpa [#allocation3], 1
    %68 = vsyncpa [#allocation6], 1
    %69 = vsyncpa [#allocation4], 1

</llo_original>
